<compile_context>
chip_gen: v5e
topology: v5e:2x2
jax: 0.10.0
libtpu: 0.0.40
codegen_flags: <defaults>
</compile_context>

<pallas_src>
import functools

import jax
import jax.numpy as jnp
from jax.experimental import pallas as pl
from jax.experimental.pallas import tpu as pltpu


_LANES = 128
_SUBLANES = 8
_SMALL_C_MAX = 32                          # transposed (lane-dense-N) layout up to here
_LOGITS_STREAM_BYTES = 16 * 1024 * 1024    # budget for double-buffered logits tiles
_VMEM_LIMIT_BYTES = 32 * 1024 * 1024


def _int_pow(x, p):
    """x ** p for a static non-negative integer p via repeated squaring (VPU only)."""
    p = int(p)
    if p == 0:
        return jnp.ones_like(x)
    acc = None
    base = x
    while p:
        if p & 1:
            acc = base if acc is None else acc * base
        p >>= 1
        if p:
            base = base * base
    return acc


def _pow_gamma(x, gamma):
    g = float(gamma)
    if g >= 0 and g == int(g):
        return _int_pow(x, int(g))
    return x ** g  # non-integer gamma: float pow fallback


def _focal_partial_kernel_cols(*refs, gamma, n_total, has_alpha):
    """Lane-dense layout: logits (C, TN), target (1, TN), [alpha (C, 1)]."""
    if has_alpha:
        logits_ref, target_ref, alpha_ref, out_ref = refs
    else:
        logits_ref, target_ref, out_ref = refs

    x = logits_ref[...].astype(jnp.float32)               # (C, TN)
    t = target_ref[...]                                   # (1, TN) int32
    c, tn = x.shape

    lane = jax.lax.broadcasted_iota(jnp.int32, (1, tn), 1)
    valid = (pl.program_id(0) * tn + lane) < n_total      # (1, TN) tail mask
    x = jnp.where(valid, x, 0.0)                          # keep padded lanes finite

    cls = jax.lax.broadcasted_iota(jnp.int32, (c, tn), 0)
    onehot = (cls == t).astype(jnp.float32)                # reused for x_t and alpha

    m = jnp.max(x, axis=0, keepdims=True)                  # (1, TN)
    lse = m + jnp.log(jnp.sum(jnp.exp(x - m), axis=0, keepdims=True))
    x_t = jnp.sum(x * onehot, axis=0, keepdims=True)
    ce = lse - x_t                                          # per-sample CE, (1, TN)

    pt = jnp.exp(-ce)
    focal = _pow_gamma(1.0 - pt, gamma) * ce

    if has_alpha:
        at = jnp.sum(alpha_ref[...].astype(jnp.float32) * onehot, axis=0, keepdims=True)
        focal = focal * at

    tile_sum = jnp.sum(jnp.where(valid, focal, 0.0), axis=1, keepdims=True)  # (1, 1)
    out_ref[...] = jnp.broadcast_to(tile_sum, out_ref.shape)


def _focal_partial_kernel_rows(*refs, gamma, n_total, has_alpha):
    """Canonical layout: logits (TN, C), target (TN, 1), [alpha (1, C)]."""
    if has_alpha:
        logits_ref, target_ref, alpha_ref, out_ref = refs
    else:
        logits_ref, target_ref, out_ref = refs

    x = logits_ref[...].astype(jnp.float32)                # (TN, C)
    t = target_ref[...]                                    # (TN, 1) int32
    tn, c = x.shape

    row = jax.lax.broadcasted_iota(jnp.int32, (tn, 1), 0)
    valid = (pl.program_id(0) * tn + row) < n_total        # (TN, 1) tail mask
    x = jnp.where(valid, x, 0.0)

    col = jax.lax.broadcasted_iota(jnp.int32, (tn, c), 1)
    onehot = (col == t).astype(jnp.float32)

    m = jnp.max(x, axis=-1, keepdims=True)
    lse = m + jnp.log(jnp.sum(jnp.exp(x - m), axis=-1, keepdims=True))
    x_t = jnp.sum(x * onehot, axis=-1, keepdims=True)
    ce = lse - x_t                                          # (TN, 1)

    pt = jnp.exp(-ce)
    focal = _pow_gamma(1.0 - pt, gamma) * ce

    if has_alpha:
        at = jnp.sum(alpha_ref[...].astype(jnp.float32) * onehot, axis=-1, keepdims=True)
        focal = focal * at

    tile_sum = jnp.sum(jnp.where(valid, focal, 0.0), axis=0, keepdims=True)  # (1, 1)
    out_ref[...] = jnp.broadcast_to(tile_sum, out_ref.shape)


def _alpha_vector(alpha, c):
    if alpha is None:
        return None
    if isinstance(alpha, (float, int)):
        alpha_list = [float(alpha), 1.0 - float(alpha)]
    else:
        alpha_list = [float(a) for a in alpha]
    # TODO(synk): PyTorch's alpha.gather(0, target) raises for target >= len(alpha);
    # here out-of-range classes get zero weight instead.
    alpha_list = (alpha_list + [0.0] * c)[:c]
    return jnp.asarray(alpha_list, dtype=jnp.float32)


def focal_loss(logits, target, *, gamma=6, alpha=None, reduction="mean",
               block_n=None):
    """Pallas implementation of FocalLoss.forward.

    logits: (N, C) float array (native dtype, bf16 stays bf16 on the DMA wire),
    target: (N,) int array.  `block_n` optionally overrides the batch tile size.
    """
    n, c = logits.shape
    itemsize = jnp.dtype(logits.dtype).itemsize
    alpha_vec = _alpha_vector(alpha, c)
    has_alpha = alpha_vec is not None

    if c <= _SMALL_C_MAX:
        # Lane-dense-in-N layout: transpose is wrapper-side layout plumbing so
        # the kernel's vregs are ~100% utilized instead of C/128.
        max_tile = max(_LANES, _LOGITS_STREAM_BYTES // (2 * c * itemsize))
        tn = block_n if block_n is not None else min(4096, max_tile)
        if tn >= n:
            tn = n
        else:
            tn = max(_LANES, (tn // _LANES) * _LANES)
        grid = (pl.cdiv(n, tn),)
        kernel = functools.partial(_focal_partial_kernel_cols, gamma=gamma,
                                   n_total=n, has_alpha=has_alpha)
        inputs = [logits.T, target.astype(jnp.int32).reshape(1, n)]
        in_specs = [
            pl.BlockSpec((c, tn), lambda i: (0, i)),
            pl.BlockSpec((1, tn), lambda i: (0, i)),
        ]
        if has_alpha:
            inputs.append(alpha_vec.reshape(c, 1))
            in_specs.append(pl.BlockSpec((c, 1), lambda i: (0, 0)))
    else:
        max_tile = max(_SUBLANES, _LOGITS_STREAM_BYTES // (2 * c * itemsize))
        tn = block_n if block_n is not None else min(1024, max_tile)
        if tn >= n:
            tn = n
        else:
            tn = max(_SUBLANES, (tn // _SUBLANES) * _SUBLANES)
        grid = (pl.cdiv(n, tn),)
        kernel = functools.partial(_focal_partial_kernel_rows, gamma=gamma,
                                   n_total=n, has_alpha=has_alpha)
        inputs = [logits, target.astype(jnp.int32).reshape(n, 1)]
        in_specs = [
            pl.BlockSpec((tn, c), lambda i: (i, 0)),
            pl.BlockSpec((tn, 1), lambda i: (i, 0)),
        ]
        if has_alpha:
            inputs.append(alpha_vec.reshape(1, c))
            in_specs.append(pl.BlockSpec((1, c), lambda i: (0, 0)))

    num_tiles = grid[0]
    partials = pl.pallas_call(
        kernel,
        out_shape=jax.ShapeDtypeStruct((num_tiles, _LANES), jnp.float32),
        grid=grid,
        in_specs=in_specs,
        out_specs=pl.BlockSpec((1, _LANES), lambda i: (i, 0)),
        compiler_params=pltpu.CompilerParams(
            dimension_semantics=("parallel",),   # independent partials -> both TCs on v7x
            vmem_limit_bytes=_VMEM_LIMIT_BYTES,
        ),
    )(*inputs)

    total = jnp.sum(partials[:, 0])
    if reduction == "mean":
        return total / jnp.float32(n)
    if reduction == "sum":
        return total
    # TODO(synk): reduction='none' (per-sample focal values) is not lowered here.
    raise NotImplementedError("only reduction='mean' / 'sum' are implemented")


def _focal_loss_ref(logits, target, gamma=6, alpha_vec=None, reduction="mean"):
    """Pure-JAX reference matching the PyTorch module."""
    logp = jax.nn.log_softmax(logits.astype(jnp.float32), axis=-1)
    ce = -jnp.take_along_axis(logp, target[:, None].astype(jnp.int32), axis=-1)[:, 0]
    pt = jnp.exp(-ce)
    focal = (1.0 - pt) ** int(gamma) * ce
    if alpha_vec is not None:
        focal = focal * alpha_vec[target]
    if reduction == "mean":
        return jnp.mean(focal)
    return jnp.sum(focal)


if __name__ == "__main__":
    key = jax.random.PRNGKey(0)

    # (name, N, C, dtype, alpha, reduction, forced batch tile)
    tests = [
        ("small_c_single_tile", 8,   4,   jnp.float32,  None, "mean", None),
        ("small_c_tiled_tail",  300, 4,   jnp.float32,  None, "mean", 128),
        ("large_c_tiled_tail",  100, 256, jnp.float32,  None, "mean", 32),
        ("alpha_binary_sum",    64,  2,   jnp.float32,  0.25, "sum",  None),
        ("bf16_logits",         8,   4,   jnp.bfloat16, None, "mean", None),
    ]

    for idx, (name, n, c, dtype, alpha, reduction, block_n) in enumerate(tests):
        kx, kt = jax.random.split(jax.random.fold_in(key, idx))
        logits = jax.random.normal(kx, (n, c), dtype=jnp.float32).astype(dtype)
        target = jax.random.randint(kt, (n,), 0, c, dtype=jnp.int32)

        out = focal_loss(logits, target, gamma=6, alpha=alpha,
                         reduction=reduction, block_n=block_n)
        out = jax.block_until_ready(out)

        ref = _focal_loss_ref(logits.astype(jnp.float32), target, gamma=6,
                              alpha_vec=_alpha_vector(alpha, c),
                              reduction=reduction)
        assert jnp.allclose(out, ref, rtol=1e-4, atol=1e-5), (name, float(out), float(ref))

    print("KERNEL_OK")
</pallas_src>

<mosaic_0001>
module attributes {stable_mosaic.version = 11 : i64} {
  func.func @_focal_partial_kernel_cols(%arg0: i32, %arg1: memref<4x8xf32, #tpu.memory_space<vmem>>, %arg2: memref<1x8xi32, #tpu.memory_space<vmem>>, %arg3: memref<1x128xf32, #tpu.memory_space<vmem>>) attributes {dimension_semantics = [#tpu.dimension_semantics<parallel>], iteration_bounds = array<i64: 1>, scalar_prefetch = 0 : i64, scratch_operands = 0 : i64, tpu.core_type = #tpu.core_type<tc>, window_params = [{transform_indices = @transform_0, window_bounds = array<i64: 4, 8>}, {transform_indices = @transform_1, window_bounds = array<i64: 1, 8>}, {transform_indices = @transform_2, window_bounds = array<i64: 1, 128>}]} {
    %c0 = arith.constant 0 : index
    %c0_0 = arith.constant 0 : index
    %0 = vector.load %arg1[%c0, %c0_0] : memref<4x8xf32, #tpu.memory_space<vmem>>, vector<4x8xf32>
    %c0_1 = arith.constant 0 : index
    %c0_2 = arith.constant 0 : index
    %1 = vector.load %arg2[%c0_1, %c0_2] : memref<1x8xi32, #tpu.memory_space<vmem>>, vector<1x8xi32>
    %2 = tpu.iota {dimensions = array<i32: 1>} : vector<1x8xi32>
    %c8_i32 = arith.constant 8 : i32
    %3 = arith.muli %arg0, %c8_i32 : i32
    %4 = vector.broadcast %3 : i32 to vector<1x8xi32>
    %5 = arith.addi %4, %2 : vector<1x8xi32>
    %c8_i32_3 = arith.constant 8 : i32
    %6 = vector.broadcast %c8_i32_3 : i32 to vector<1x8xi32>
    %7 = arith.cmpi slt, %5, %6 : vector<1x8xi32>
    %cst = arith.constant 0.000000e+00 : f32
    %8 = vector.shape_cast %7 : vector<1x8xi1> to vector<1x8xi1>
    %9 = vector.broadcast %8 : vector<1x8xi1> to vector<4x8xi1>
    %10 = vector.broadcast %cst : f32 to vector<4x8xf32>
    %11 = arith.select %9, %0, %10 : vector<4x8xi1>, vector<4x8xf32>
    %12 = tpu.iota {dimensions = array<i32: 0>} : vector<4x8xi32>
    %13 = vector.broadcast %1 : vector<1x8xi32> to vector<4x8xi32>
    %14 = arith.cmpi eq, %12, %13 : vector<4x8xi32>
    %15 = arith.extui %14 : vector<4x8xi1> to vector<4x8xi32>
    %16 = arith.sitofp %15 : vector<4x8xi32> to vector<4x8xf32>
    %cst_4 = arith.constant dense<0xFF800000> : vector<8xf32>
    %17 = vector.multi_reduction <maximumf>, %11, %cst_4 [0] : vector<4x8xf32> to vector<8xf32>
    %18 = vector.shape_cast %17 : vector<8xf32> to vector<1x8xf32>
    %19 = vector.broadcast %18 : vector<1x8xf32> to vector<4x8xf32>
    %20 = arith.subf %11, %19 : vector<4x8xf32>
    %21 = math.exp %20 : vector<4x8xf32>
    %cst_5 = arith.constant dense<0.000000e+00> : vector<8xf32>
    %22 = vector.multi_reduction <add>, %21, %cst_5 [0] : vector<4x8xf32> to vector<8xf32>
    %23 = vector.shape_cast %22 : vector<8xf32> to vector<1x8xf32>
    %24 = math.log %23 : vector<1x8xf32>
    %25 = arith.addf %18, %24 : vector<1x8xf32>
    %26 = arith.mulf %11, %16 : vector<4x8xf32>
    %cst_6 = arith.constant dense<0.000000e+00> : vector<8xf32>
    %27 = vector.multi_reduction <add>, %26, %cst_6 [0] : vector<4x8xf32> to vector<8xf32>
    %28 = vector.shape_cast %27 : vector<8xf32> to vector<1x8xf32>
    %29 = arith.subf %25, %28 : vector<1x8xf32>
    %cst_7 = arith.constant 0.000000e+00 : f32
    %30 = vector.broadcast %cst_7 : f32 to vector<1x8xf32>
    %31 = arith.subf %30, %29 : vector<1x8xf32>
    %32 = math.exp %31 : vector<1x8xf32>
    %cst_8 = arith.constant 1.000000e+00 : f32
    %33 = vector.broadcast %cst_8 : f32 to vector<1x8xf32>
    %34 = arith.subf %33, %32 : vector<1x8xf32>
    %35 = arith.mulf %34, %34 : vector<1x8xf32>
    %36 = arith.mulf %35, %35 : vector<1x8xf32>
    %37 = arith.mulf %35, %36 : vector<1x8xf32>
    %38 = arith.mulf %37, %29 : vector<1x8xf32>
    %cst_9 = arith.constant 0.000000e+00 : f32
    %39 = vector.broadcast %cst_9 : f32 to vector<1x8xf32>
    %40 = arith.select %7, %38, %39 : vector<1x8xi1>, vector<1x8xf32>
    %cst_10 = arith.constant dense<0.000000e+00> : vector<1xf32>
    %41 = vector.multi_reduction <add>, %40, %cst_10 [1] : vector<1x8xf32> to vector<1xf32>
    %42 = vector.shape_cast %41 : vector<1xf32> to vector<1x1xf32>
    %43 = vector.shape_cast %42 : vector<1x1xf32> to vector<1x1xf32>
    %44 = vector.broadcast %43 : vector<1x1xf32> to vector<1x128xf32>
    %c0_11 = arith.constant 0 : index
    %c0_12 = arith.constant 0 : index
    %45 = vector.load %arg3[%c0_11, %c0_12] : memref<1x128xf32, #tpu.memory_space<vmem>>, vector<1x128xf32>
    tpu.vector_store %arg3[%c0_11, %c0_12], %44 {strides = array<i32>} : memref<1x128xf32, #tpu.memory_space<vmem>>, vector<1x128xf32>,
    return
  }
  func.func @transform_0(%arg0: i32) -> (i32, i32) {
    %c0_i32 = arith.constant 0 : i32
    %c0_i32_0 = arith.constant 0 : i32
    return %c0_i32, %arg0 : i32, i32
  }
  func.func @transform_1(%arg0: i32) -> (i32, i32) {
    %c0_i32 = arith.constant 0 : i32
    %c0_i32_0 = arith.constant 0 : i32
    return %c0_i32, %arg0 : i32, i32
  }
  func.func @transform_2(%arg0: i32) -> (i32, i32) {
    %c0_i32 = arith.constant 0 : i32
    %c0_i32_0 = arith.constant 0 : i32
    return %arg0, %c0_i32 : i32, i32
  }
}

</mosaic_0001>

<llo_original>
// kernel: tpu_custom_call.1
$region0: #{tpu_custom_call.1}
  #allocation0 [shape = 'u32[]', space=smem, size = 0x4, offset = 0x4, fixed_abs, tag = 'smem constant byte address 0x4 - core index']
  #allocation1 [shape = 'u32[72,128]{1,0:T(1,128)}', space=vmem, size = 0x9000, scoped, tag = 'internal scratch']
  %s0 = inlined_call_operand.hbm [shape: f32[4,8], index: 0, kind: input, shape index: {}]
  %s1 = inlined_call_operand.hbm [shape: s32[1,8], index: 1, kind: input, shape index: {}]
  %s2 = inlined_call_operand.hbm [shape: f32[1,128], index: 2, kind: output, shape index: {}]
  %s3 = sld [smem:[#allocation0]]
  $region26: #{tpu_custom_call.1} parent=0
    _
  %s5 = ssub.s32 1, %s3
  %s6 = scalar_select 0, %s5, %s3
  $region1: #{tpu_custom_call.1} parent=0
    #allocation2 [shape = 'u8[2048]{0}', space=vmem, size = 0x800, scoped, tag = 'input window, operand 0, single buffered']
    #allocation3 [shape = 's32[1]{0}', space=sflag, size = 0x4, scoped, tag = 'scoped memory for tpu_custom_call.1']
    #allocation4 [shape = 's32[1]{0}', space=sflag, size = 0x4, scoped, tag = 'scoped memory for tpu_custom_call.1']
    #allocation5 [shape = 'u8[512]{0}', space=vmem, size = 0x400, scoped, tag = 'input window, operand 1, single buffered']
    #allocation6 [shape = 's32[1]{0}', space=sflag, size = 0x4, scoped, tag = 'scoped memory for tpu_custom_call.1']
    #allocation7 [shape = 'u8[512]{0}', space=vmem, size = 0x400, scoped, tag = 'output window, operand 0, single buffered']
    %7 = vsyncpa [#allocation3], 0
    %8 = vsyncpa [#allocation6], 0
    %9 = vsyncpa [#allocation4], 0
    // Predicated region
    $region2: #{tpu_custom_call.1} parent=1 // pred_check
      _
    $region3: #{tpu_custom_call.1} parent=1 // pred_check_branch
      %11 = sbr.rel (0) target = $region5
    $region4: #{tpu_custom_call.1} parent=1 // pred_region
      %13 = vsyncadd [#allocation3], 0
      %s15 = sshll.u32 %s0, 4
      %s16 = int_to_ptr.hbm [resolvable:$true] %s15
      %s17 = sshll.u32 [#allocation2], 4
      %s18 = int_to_ptr.vmem [resolvable:$true] %s17
      %20 = dma.hbm_to_vmem [thread:$0]  %s16, 64, %s18, [#allocation3]
    $region5: #{tpu_custom_call.1} parent=1 // pred_fallthru
      _
    // Predicated region
    $region6: #{tpu_custom_call.1} parent=1 // pred_check
      _
    $region7: #{tpu_custom_call.1} parent=1 // pred_check_branch
      %22 = sbr.rel (0) target = $region9
    $region8: #{tpu_custom_call.1} parent=1 // pred_region
      %24 = vsyncadd [#allocation6], 0
      %s26 = sshll.u32 %s1, 4
      %s27 = int_to_ptr.hbm [resolvable:$true] %s26
      %s28 = sshll.u32 [#allocation5], 4
      %s29 = int_to_ptr.vmem [resolvable:$true] %s28
      %31 = dma.hbm_to_vmem [thread:$0]  %s27, 16, %s29, [#allocation6]
    $region9: #{tpu_custom_call.1} parent=1 // pred_fallthru
      _
    // Predicated region
    $region10: #{tpu_custom_call.1} parent=1 // pred_check
      _
    $region11: #{tpu_custom_call.1} parent=1 // pred_check_branch
      %33 = sbr.rel (0) target = $region13
    $region12: #{tpu_custom_call.1} parent=1 // pred_region
      %35 = dma.done [#allocation3], 64
    $region13: #{tpu_custom_call.1} parent=1 // pred_fallthru
      _
    // Predicated region
    $region14: #{tpu_custom_call.1} parent=1 // pred_check
      _
    $region15: #{tpu_custom_call.1} parent=1 // pred_check_branch
      %37 = sbr.rel (0) target = $region17
    $region16: #{tpu_custom_call.1} parent=1 // pred_region
      %39 = dma.done [#allocation6], 16
    $region17: #{tpu_custom_call.1} parent=1 // pred_fallthru
      _
    %v40 = vld [vmem:[#allocation2] sm:$0xf]
    %v41 = vld [vmem:[#allocation5] sm:$0x1]
    %v42 = vlaneseq
    %v43 = vand.u32 %v42, 127
    %s44 = smul.u32 0, 8
    %v45 = vstv %s44
    %v46 = vadd.s32 %v45, %v43
    %vm47 = vcmp.lt.s32.totalorder %v46, 8
    %v48 = vsel %vm47, 1, 0
    %vm49 = vcmp.eq.s32.totalorder %v48, 1
    %v50 = vsel %vm49, %v40, 0.0
    %v51 = vlaneseq
    %v52 = vshrl.u32 %v51, 7
    %v53 = vperm.slane %v41, 0
    %vm54 = vcmp.eq.s32.totalorder %v52, %v53
    %v55 = vsel %vm54, 1, 0
    %v56 = vcvt.s32.f32 %v55
    %vm57 = vcmask 60416
    %v58 = vsel %vm57, %v50, -inf
    %v59 = vrot.slane %v58, 4
    %v60 = vmax.f32 %v58, %v59
    %v61 = vrot.slane %v60, 2
    %v62 = vmax.f32 %v60, %v61
    %v63 = vrot.slane %v62, 1
    %v64 = vmax.f32 %v62, %v63
    %v65 = vsub.f32 %v50, %v64
    %v66 = vmul.f32 %v65, 1.442695
    %v67 = vpow.pop %v66
    %v68 = vsel %vm57, %v67, 0.0
    %v69 = vrot.slane %v68, 4
    %v70 = vadd.f32 %v68, %v69
    %v71 = vrot.slane %v70, 2
    %v72 = vadd.f32 %v70, %v71
    %v73 = vrot.slane %v72, 1
    %v74 = vadd.f32 %v72, %v73
    %v75 = vlog2.pop %v74
    %v76 = vmul.f32 %v75, 0.6931472
    %v77 = vadd.f32 %v64, %v76
    %v78 = vmul.f32 %v50, %v56
    %v79 = vsel %vm57, %v78, 0.0
    %v80 = vrot.slane %v79, 4
    %v81 = vadd.f32 %v79, %v80
    %v82 = vrot.slane %v81, 2
    %v83 = vadd.f32 %v81, %v82
    %v84 = vrot.slane %v83, 1
    %v85 = vadd.f32 %v83, %v84
    %v86 = vsub.f32 %v77, %v85
    %v87 = vsub.f32 0.0, %v86
    %v88 = vmul.f32 %v87, 1.442695
    %v89 = vpow.pop %v88
    %v90 = vsub.f32 1.0, %v89
    %v91 = vmul.f32 %v90, %v90
    %v92 = vmul.f32 %v91, %v91
    %v93 = vmul.f32 %v91, %v92
    %v94 = vmul.f32 %v93, %v86
    %v95 = vsel %vm47, %v94, 0.0
    %vm96 = vcmask 64512
    %v97 = vsel %vm96, %v95, 0.0
    %98 = vadd.xlane.f32.xlu0 %v97
    %v99 = vpop.xlane.xlu0 %98
    %100 = vst [vmem:[#allocation7] sm:$0x1] %v99
    // Predicated region
    $region18: #{tpu_custom_call.1} parent=1 // pred_check
      _
    $region19: #{tpu_custom_call.1} parent=1 // pred_check_branch
      %102 = sbr.rel (0) target = $region21
    $region20: #{tpu_custom_call.1} parent=1 // pred_region
      %104 = vsyncadd [#allocation4], 0
      %s106 = sshll.u32 [#allocation7], 4
      %s107 = int_to_ptr.vmem [resolvable:$true] %s106
      %s108 = sshll.u32 %s2, 4
      %s109 = int_to_ptr.hbm [resolvable:$true] %s108
      %111 = dma.vmem_to_hbm [thread:$0]  %s107, 16, %s109, [#allocation4]
    $region21: #{tpu_custom_call.1} parent=1 // pred_fallthru
      _
    // Predicated region
    $region22: #{tpu_custom_call.1} parent=1 // pred_check
      _
    $region23: #{tpu_custom_call.1} parent=1 // pred_check_branch
      %113 = sbr.rel (0) target = $region25
    $region24: #{tpu_custom_call.1} parent=1 // pred_region
      %115 = dma.done [#allocation4], 16
    $region25: #{tpu_custom_call.1} parent=1 // pred_fallthru
      _
    %116 = vsyncpa [#allocation3], 1
    %117 = vsyncpa [#allocation6], 1
    %118 = vsyncpa [#allocation4], 1

</llo_original>
